<compile_context>
chip_gen: v7x
topology: tpu7x:2x2x1
jax: 0.10.0
libtpu: 0.0.40
codegen_flags: <defaults>
</compile_context>

<pallas_src>
import functools
import numpy as np
import jax
import jax.numpy as jnp
from jax.experimental import pallas as pl
from jax.experimental.pallas import tpu as pltpu


def _round_up(v, m):
    return ((v + m - 1) // m) * m


def _default_vmem_limit():
    """Per-generation scoped-VMEM budget: ~half of physical VMEM, capped at 96 MiB.
    v5e/v6e (128 MiB physical) -> 64 MiB; v7x (64 MiB physical) -> 32 MiB."""
    try:
        cap = pltpu.get_tpu_info().vmem_capacity_bytes
        return int(min(cap // 2, 96 * 1024 * 1024))
    except Exception:
        return 32 * 1024 * 1024


_VMEM_LIMIT = _default_vmem_limit()
# Bigger M tiles where VMEM allows (v5e/v6e); stay at 256 on v7x (64 MiB physical VMEM).
_TM_MAX = 512 if _VMEM_LIMIT >= 64 * 1024 * 1024 else 256
_FULL_K_MAX = 2304  # single-K-step threshold (covers every ResNet-50 matmul, K <= 2048)


# ------------------------------ Pallas kernels ------------------------------

def _mm_single_kernel(*refs, relu, has_residual):
    """Single-K-step matmul: relu?((a @ b) * scale + bias [+ residual]).
    No accumulator scratch / pl.when: the whole K reduction is one MXU dot."""
    if has_residual:
        a_ref, b_ref, s_ref, c_ref, r_ref, o_ref = refs
    else:
        a_ref, b_ref, s_ref, c_ref, o_ref = refs
        r_ref = None
    y = jnp.dot(a_ref[...], b_ref[...], preferred_element_type=jnp.float32)
    y = y * s_ref[...] + c_ref[...]
    if has_residual:
        y = y + r_ref[...].astype(jnp.float32)
    if relu:
        y = jnp.maximum(y, 0.0)
    o_ref[...] = y.astype(o_ref.dtype)


def _mm_loop_kernel(*refs, relu, has_residual):
    """K-looped fallback (K > _FULL_K_MAX): f32 VMEM accumulator + fused epilogue."""
    if has_residual:
        a_ref, b_ref, s_ref, c_ref, r_ref, o_ref, acc_ref = refs
    else:
        a_ref, b_ref, s_ref, c_ref, o_ref, acc_ref = refs
        r_ref = None

    @pl.when(pl.program_id(2) == 0)
    def _():
        acc_ref[...] = jnp.zeros_like(acc_ref)

    acc_ref[...] += jnp.dot(a_ref[...], b_ref[...],
                            preferred_element_type=jnp.float32)

    @pl.when(pl.program_id(2) == pl.num_programs(2) - 1)
    def _():
        y = acc_ref[...] * s_ref[...] + c_ref[...]
        if has_residual:
            y = y + r_ref[...].astype(jnp.float32)
        if relu:
            y = jnp.maximum(y, 0.0)
        o_ref[...] = y.astype(o_ref.dtype)


def _conv_taps_kernel(x_ref, w_ref, s_ref, c_ref, o_ref, *,
                      kh, kw, stride, OH, OW, relu):
    """Fused KxK conv: the taps are static shifted slices of the phase-decomposed
    activation held once in VMEM (no im2col patch array in HBM).  f32 accumulation,
    fused BN scale/bias + ReLU epilogue."""
    cin = w_ref.shape[1]
    tn = o_ref.shape[-1]
    acc = jnp.zeros((OH * OW, tn), jnp.float32)
    for i in range(kh):
        for j in range(kw):
            phase = (i % stride) * stride + (j % stride)
            oi, oj = i // stride, j // stride
            a = x_ref[0, phase, oi:oi + OH, oj:oj + OW, :].reshape(OH * OW, cin)
            acc = acc + jnp.dot(a, w_ref[i * kw + j],
                                preferred_element_type=jnp.float32)
    y = acc * s_ref[...] + c_ref[...]
    if relu:
        y = jnp.maximum(y, 0.0)
    o_ref[...] = y.reshape(1, OH, OW, tn).astype(o_ref.dtype)


def _maxpool_taps_kernel(x_ref, o_ref, *, k, stride, OH, OW, C):
    """3x3 stride-2 max pool over the phase-decomposed input.  Channels are folded into
    the lane dim (last dim = OW*C) so loads/stores are lane-dense."""
    res = None
    for i in range(k):
        for j in range(k):
            phase = (i % stride) * stride + (j % stride)
            oi, oj = i // stride, j // stride
            xs = x_ref[0, phase, oi:oi + OH, oj * C:(oj + OW) * C]
            res = xs if res is None else jnp.maximum(res, xs)
    o_ref[0] = res


def _pool_fc_kernel(x_ref, w_ref, b_ref, o_ref, *, inv_hw):
    """Global average pool fused with the final Linear: f32 sum over HW, 1/(H*W)
    folded into the features, one MXU dot + bias, f32 logits."""
    feats = jnp.sum(x_ref[...].astype(jnp.float32), axis=1) * inv_hw
    y = jnp.dot(feats.astype(jnp.bfloat16), w_ref[...],
                preferred_element_type=jnp.float32) + b_ref[...]
    o_ref[...] = y


# ------------------------------ Pallas wrappers ------------------------------

def matmul_bn_act(a, b, scale, bias, relu, residual=None, out_dtype=jnp.bfloat16):
    """relu?((a @ b) * scale + bias [+ residual]).  a:[M,K] b:[K,N] scale/bias:[N]."""
    a = a.astype(jnp.bfloat16)
    b = b.astype(jnp.bfloat16)
    scale = scale.astype(jnp.float32)
    bias = bias.astype(jnp.float32)

    M, K = a.shape
    K2, N = b.shape
    assert K2 == K

    # ---- N tiling (only pad when N > 128 and ragged) ----
    if N % 128 == 0:
        Np = N
        tn = 256 if (N % 256 == 0 and N >= 256) else 128
    elif N < 128:
        Np, tn = N, N
    else:
        Np = _round_up(N, 128)
        tn = 128

    # ---- M tiling ----
    tm = _round_up(M, 8) if M <= _TM_MAX else _TM_MAX
    Mp = _round_up(M, tm)

    # ---- K: single full-K step whenever it fits (all ResNet-50 matmuls do) ----
    single_k = K <= _FULL_K_MAX
    if single_k:
        Kp, tk = K, K
    else:
        Kp = _round_up(K, 512)
        tk = 512

    # ---- guarantee >=2 blocks over the parallel axes (v7x has 2 TensorCores) ----
    if (Mp // tm) * (Np // tn) < 2:
        if tn > 128 and Np % 256 == 0:
            tn = Np // 2 if (Np // 2) % 128 == 0 else 128
        elif Mp >= 16:
            tm = _round_up(Mp // 2, 8)
            Mp = _round_up(M, tm)

    a_p = a if (Mp == M and Kp == K) else jnp.pad(a, ((0, Mp - M), (0, Kp - K)))
    b_p = b if (Kp == K and Np == N) else jnp.pad(b, ((0, Kp - K), (0, Np - N)))
    s_p = (scale if Np == N else jnp.pad(scale, (0, Np - N))).reshape(1, Np)
    c_p = (bias if Np == N else jnp.pad(bias, (0, Np - N))).reshape(1, Np)

    has_residual = residual is not None
    inputs = [a_p, b_p, s_p, c_p]
    if has_residual:
        r = residual.astype(jnp.bfloat16)
        r_p = r if (Mp == M and Np == N) else jnp.pad(r, ((0, Mp - M), (0, Np - N)))
        inputs.append(r_p)

    flops = 2 * Mp * Np * Kp
    bytes_accessed = (2 * (Mp * Kp + Kp * Np) + 8 * Np
                      + Mp * Np * (2 + (2 if has_residual else 0)))

    if single_k:
        in_specs = [
            pl.BlockSpec((tm, Kp), lambda i, j: (i, 0)),
            pl.BlockSpec((Kp, tn), lambda i, j: (0, j)),
            pl.BlockSpec((1, tn), lambda i, j: (0, j)),
            pl.BlockSpec((1, tn), lambda i, j: (0, j)),
        ]
        if has_residual:
            in_specs.append(pl.BlockSpec((tm, tn), lambda i, j: (i, j)))
        out = pl.pallas_call(
            functools.partial(_mm_single_kernel, relu=relu,
                              has_residual=has_residual),
            out_shape=jax.ShapeDtypeStruct((Mp, Np), out_dtype),
            grid=(Mp // tm, Np // tn),
            in_specs=in_specs,
            out_specs=pl.BlockSpec((tm, tn), lambda i, j: (i, j)),
            compiler_params=pltpu.CompilerParams(
                dimension_semantics=("parallel", "parallel"),
                vmem_limit_bytes=_VMEM_LIMIT),
            cost_estimate=pl.CostEstimate(flops=flops, transcendentals=0,
                                          bytes_accessed=bytes_accessed),
        )(*inputs)
    else:
        in_specs = [
            pl.BlockSpec((tm, tk), lambda i, j, k: (i, k)),
            pl.BlockSpec((tk, tn), lambda i, j, k: (k, j)),
            pl.BlockSpec((1, tn), lambda i, j, k: (0, j)),
            pl.BlockSpec((1, tn), lambda i, j, k: (0, j)),
        ]
        if has_residual:
            in_specs.append(pl.BlockSpec((tm, tn), lambda i, j, k: (i, j)))
        out = pl.pallas_call(
            functools.partial(_mm_loop_kernel, relu=relu,
                              has_residual=has_residual),
            out_shape=jax.ShapeDtypeStruct((Mp, Np), out_dtype),
            grid=(Mp // tm, Np // tn, Kp // tk),
            in_specs=in_specs,
            out_specs=pl.BlockSpec((tm, tn), lambda i, j, k: (i, j)),
            scratch_shapes=[pltpu.VMEM((tm, tn), jnp.float32)],
            compiler_params=pltpu.CompilerParams(
                dimension_semantics=("parallel", "parallel", "arbitrary"),
                vmem_limit_bytes=_VMEM_LIMIT),
            cost_estimate=pl.CostEstimate(flops=flops, transcendentals=0,
                                          bytes_accessed=bytes_accessed),
        )(*inputs)

    if Mp != M or Np != N:
        out = out[:M, :N]
    return out


def _phase_decompose(x, kh, kw, stride, pad, pad_value=0.0):
    """Pad the NHWC input and split it into stride*stride phase-subsampled slices so each
    of the kh*kw conv/pool taps becomes a static shifted slice inside the kernel.
    HBM footprint ~1x the activation (vs. kh*kw x for im2col)."""
    N, H, W, C = x.shape
    OH = (H + 2 * pad - kh) // stride + 1
    OW = (W + 2 * pad - kw) // stride + 1
    PH = OH + (kh - 1) // stride
    PW = OW + (kw - 1) // stride
    eh = max(0, stride * PH - (H + 2 * pad))
    ew = max(0, stride * PW - (W + 2 * pad))
    xp = jnp.pad(x, ((0, 0), (pad, pad + eh), (pad, pad + ew), (0, 0)),
                 constant_values=pad_value)
    phases = [xp[:, pi::stride, pj::stride, :][:, :PH, :PW, :]
              for pi in range(stride) for pj in range(stride)]
    xph = jnp.stack(phases, axis=1)          # [N, stride*stride, PH, PW, C]
    return xph, OH, OW, PH, PW


def conv_bn_fused(x, w, scale, bias, stride, pad, relu):
    """KxK Conv2d(bias=False) + folded BN + optional ReLU with the tap gather fused
    into the kernel (no im2col patch materialization in HBM)."""
    kh, kw, cin, cout = w.shape
    N = x.shape[0]
    xph, OH, OW, PH, PW = _phase_decompose(x.astype(jnp.bfloat16), kh, kw, stride,
                                           pad, pad_value=0.0)
    wt = w.reshape(kh * kw, cin, cout).astype(jnp.bfloat16)
    s_p = scale.astype(jnp.float32).reshape(1, cout)
    c_p = bias.astype(jnp.float32).reshape(1, cout)

    if cout % 256 == 0:
        tn = 256
    elif cout % 128 == 0:
        tn = 128
    else:
        tn = cout

    ss = stride * stride
    flops = 2 * N * OH * OW * kh * kw * cin * cout
    bytes_accessed = (N * ss * PH * PW * cin * 2 + kh * kw * cin * cout * 2
                      + 8 * cout + N * OH * OW * cout * 2)

    out = pl.pallas_call(
        functools.partial(_conv_taps_kernel, kh=kh, kw=kw, stride=stride,
                          OH=OH, OW=OW, relu=relu),
        out_shape=jax.ShapeDtypeStruct((N, OH, OW, cout), jnp.bfloat16),
        grid=(N, cout // tn),
        in_specs=[
            pl.BlockSpec((1, ss, PH, PW, cin), lambda n, co: (n, 0, 0, 0, 0)),
            pl.BlockSpec((kh * kw, cin, tn), lambda n, co: (0, 0, co)),
            pl.BlockSpec((1, tn), lambda n, co: (0, co)),
            pl.BlockSpec((1, tn), lambda n, co: (0, co)),
        ],
        out_specs=pl.BlockSpec((1, OH, OW, tn), lambda n, co: (n, 0, 0, co)),
        compiler_params=pltpu.CompilerParams(
            dimension_semantics=("parallel", "parallel"),
            vmem_limit_bytes=_VMEM_LIMIT),
        cost_estimate=pl.CostEstimate(flops=flops, transcendentals=0,
                                      bytes_accessed=bytes_accessed),
    )(xph, wt, s_p, c_p)
    return out


def conv1x1_bn(x, w, scale, bias, stride, relu, residual=None):
    """1x1 Conv2d(bias=False) + folded BN [+ residual] [+ ReLU] as a flat matmul."""
    if stride > 1:
        x = x[:, ::stride, ::stride, :]
    N, OH, OW, cin = x.shape
    cout = w.shape[-1]
    a = x.reshape(N * OH * OW, cin)
    res = None if residual is None else residual.reshape(N * OH * OW, cout)
    y = matmul_bn_act(a, w.reshape(cin, cout), scale, bias, relu, residual=res)
    return y.reshape(N, OH, OW, cout)


def im2col(x, kh, kw, stride, pad):
    """x: NHWC -> patches [N*OH*OW, kh*kw*C].  Only used for the 7x7 stem."""
    N, H, W, C = x.shape
    OH = (H + 2 * pad - kh) // stride + 1
    OW = (W + 2 * pad - kw) // stride + 1
    xp = jnp.pad(x, ((0, 0), (pad, pad), (pad, pad), (0, 0)))
    taps = [xp[:, i:i + stride * OH:stride, j:j + stride * OW:stride, :]
            for i in range(kh) for j in range(kw)]
    p = jnp.stack(taps, axis=3)                      # [N, OH, OW, kh*kw, C]
    return p.reshape(N * OH * OW, kh * kw * C), OH, OW


def conv_bn_im2col(x, w, scale, bias, stride, pad, relu):
    # TODO(synk): the 7x7 stem still materializes im2col patches; kept because 49
    # K=3 taps would badly underfill the MXU and the absolute inflation is small (C=3).
    kh, kw, cin, cout = w.shape
    N = x.shape[0]
    patches, OH, OW = im2col(x, kh, kw, stride, pad)
    y = matmul_bn_act(patches, w.reshape(kh * kw * cin, cout), scale, bias, relu)
    return y.reshape(N, OH, OW, cout)


def maxpool_3x3_s2_p1(x):
    """3x3 stride-2 pad-1 max pool.  Taps are reduced in-kernel from the phase-
    decomposed input (no [9, M, C] HBM stack); channels folded into the lane dim
    (last dim OW*C) for lane-dense loads/stores."""
    N, H, W, C = x.shape
    k, s, pad = 3, 2, 1
    xph, OH, OW, PH, PW = _phase_decompose(x, k, k, s, pad,
                                           pad_value=float('-inf'))
    xph = xph.reshape(N, s * s, PH, PW * C)
    out = pl.pallas_call(
        functools.partial(_maxpool_taps_kernel, k=k, stride=s, OH=OH, OW=OW, C=C),
        out_shape=jax.ShapeDtypeStruct((N, OH, OW * C), x.dtype),
        grid=(N,),
        in_specs=[pl.BlockSpec((1, s * s, PH, PW * C), lambda n: (n, 0, 0, 0))],
        out_specs=pl.BlockSpec((1, OH, OW * C), lambda n: (n, 0, 0)),
        compiler_params=pltpu.CompilerParams(
            dimension_semantics=("parallel",),
            vmem_limit_bytes=_VMEM_LIMIT),
    )(xph)
    return out.reshape(N, OH, OW, C)


def avgpool_fc(x, fc_w, fc_b):
    """Global average pool fused with the final nn.Linear (one Pallas call)."""
    N, H, W, C = x.shape
    HW = H * W
    ncls = fc_w.shape[-1]
    xr = x.reshape(N, HW, C)
    return pl.pallas_call(
        functools.partial(_pool_fc_kernel, inv_hw=1.0 / HW),
        out_shape=jax.ShapeDtypeStruct((N, ncls), jnp.float32),
        grid=(1,),
        in_specs=[
            pl.BlockSpec((N, HW, C), lambda i: (0, 0, 0)),
            pl.BlockSpec((C, ncls), lambda i: (0, 0)),
            pl.BlockSpec((1, ncls), lambda i: (0, 0)),
        ],
        out_specs=pl.BlockSpec((N, ncls), lambda i: (0, 0)),
        compiler_params=pltpu.CompilerParams(
            dimension_semantics=("arbitrary",),
            vmem_limit_bytes=_VMEM_LIMIT),
    )(xr, fc_w.astype(jnp.bfloat16), fc_b.astype(jnp.float32).reshape(1, ncls))


# ------------------------------ parameter setup ------------------------------

def _make_conv(key, kh, kw, cin, cout):
    fan_in = kh * kw * cin
    w = jax.random.normal(key, (kh, kw, cin, cout), jnp.float32) / np.sqrt(fan_in)
    return w.astype(jnp.bfloat16)


def _make_bn(key, c):
    kg, kb = jax.random.split(key)
    gamma = 1.0 + 0.1 * jax.random.normal(kg, (c,), jnp.float32)
    beta = 0.1 * jax.random.normal(kb, (c,), jnp.float32)
    running_mean = jnp.zeros((c,), jnp.float32)
    running_var = jnp.ones((c,), jnp.float32)
    eps = 1e-5
    scale = gamma / jnp.sqrt(running_var + eps)
    bias = beta - running_mean * scale
    return scale, bias


def _make_bottleneck(key, cin, planes, stride):
    ks = jax.random.split(key, 8)
    p = {
        'conv1': (_make_conv(ks[0], 1, 1, cin, planes),) + _make_bn(ks[1], planes),
        'conv2': (_make_conv(ks[2], 3, 3, planes, planes),) + _make_bn(ks[3], planes),
        'conv3': (_make_conv(ks[4], 1, 1, planes, planes * 4),) + _make_bn(ks[5], planes * 4),
        'stride': stride,
        'down': None,
    }
    if stride != 1 or cin != planes * 4:
        p['down'] = (_make_conv(ks[6], 1, 1, cin, planes * 4),) + _make_bn(ks[7], planes * 4)
    return p


def make_resnet50_params(key, num_classes):
    keys = jax.random.split(key, 4)
    params = {}
    params['stem'] = (_make_conv(keys[0], 7, 7, 3, 64),) + _make_bn(keys[1], 64)

    cfg = [(64, 3, 1), (128, 4, 2), (256, 6, 2), (512, 3, 2)]  # ResNet-50
    cin = 64
    layer_keys = jax.random.split(keys[2], 4)
    layers = []
    for (planes, nblocks, stride), lk in zip(cfg, layer_keys):
        bkeys = jax.random.split(lk, nblocks)
        blocks = []
        for bi in range(nblocks):
            s = stride if bi == 0 else 1
            blocks.append(_make_bottleneck(bkeys[bi], cin, planes, s))
            cin = planes * 4
        layers.append(blocks)
    params['layers'] = layers

    fk1, fk2 = jax.random.split(keys[3])
    params['fc_w'] = (jax.random.normal(fk1, (2048, num_classes), jnp.float32)
                      / np.sqrt(2048.0)).astype(jnp.bfloat16)
    params['fc_b'] = 0.01 * jax.random.normal(fk2, (num_classes,), jnp.float32)
    return params


# -------------------------------- forward pass -------------------------------

def bottleneck_forward(x, p):
    stride = p['stride']
    if p['down'] is not None:
        w, s, b = p['down']
        identity = conv1x1_bn(x, w, s, b, stride=stride, relu=False)
    else:
        identity = x
    w, s, b = p['conv1']
    out = conv1x1_bn(x, w, s, b, stride=1, relu=True)
    w, s, b = p['conv2']
    out = conv_bn_fused(out, w, s, b, stride=stride, pad=1, relu=True)
    w, s, b = p['conv3']
    # conv3 1x1 + BN + residual add + ReLU fused into one matmul epilogue
    out = conv1x1_bn(out, w, s, b, stride=1, relu=True, residual=identity)
    return out


def resnet50_forward(x_nchw, params):
    x = jnp.transpose(x_nchw, (0, 2, 3, 1)).astype(jnp.bfloat16)  # NCHW -> NHWC bf16
    w, s, b = params['stem']
    x = conv_bn_im2col(x, w, s, b, stride=2, pad=3, relu=True)
    x = maxpool_3x3_s2_p1(x)
    for blocks in params['layers']:
        for blk in blocks:
            x = bottleneck_forward(x, blk)
    return avgpool_fc(x, params['fc_w'], params['fc_b'])   # [N, num_classes] f32


# ------------------------------------ main ------------------------------------

if __name__ == "__main__":
    num_classes = 10
    key = jax.random.PRNGKey(0)
    pkey, xkey = jax.random.split(key)

    params = make_resnet50_params(pkey, num_classes)
    # small input consistent with the module's NCHW image interface
    x = jax.random.normal(xkey, (2, 3, 32, 32), jnp.float32)

    logits = resnet50_forward(x, params)
    logits = jax.block_until_ready(logits)

    assert logits.shape == (2, num_classes), logits.shape
    assert bool(jnp.all(jnp.isfinite(logits)))
    print("KERNEL_OK")
</pallas_src>

<mosaic_0001>
module attributes {stable_mosaic.version = 11 : i64} {
  func.func @_mm_single_kernel(%arg0: i32, %arg1: i32, %arg2: memref<256x147xbf16, #tpu.memory_space<vmem>>, %arg3: memref<147x64xbf16, #tpu.memory_space<vmem>>, %arg4: memref<1x64xf32, #tpu.memory_space<vmem>>, %arg5: memref<1x64xf32, #tpu.memory_space<vmem>>, %arg6: memref<256x64xbf16, #tpu.memory_space<vmem>>) attributes {dimension_semantics = [#tpu.dimension_semantics<parallel>, #tpu.dimension_semantics<parallel>], iteration_bounds = array<i64: 2, 1>, scalar_prefetch = 0 : i64, scratch_operands = 0 : i64, tpu.core_type = #tpu.core_type<tc>, window_params = [{transform_indices = @transform_0, window_bounds = array<i64: 256, 147>}, {transform_indices = @transform_1, window_bounds = array<i64: 147, 64>}, {transform_indices = @transform_2, window_bounds = array<i64: 1, 64>}, {transform_indices = @transform_3, window_bounds = array<i64: 1, 64>}, {transform_indices = @transform_4, window_bounds = array<i64: 256, 64>}]} {
    %c0 = arith.constant 0 : index
    %c0_0 = arith.constant 0 : index
    %0 = vector.load %arg2[%c0, %c0_0] : memref<256x147xbf16, #tpu.memory_space<vmem>>, vector<256x147xbf16>
    %c0_1 = arith.constant 0 : index
    %c0_2 = arith.constant 0 : index
    %1 = vector.load %arg3[%c0_1, %c0_2] : memref<147x64xbf16, #tpu.memory_space<vmem>>, vector<147x64xbf16>
    %cst = arith.constant dense<0.000000e+00> : vector<256x64xf32>
    %2 = tpu.matmul %0, %1, %cst {dimension_numbers = #tpu.dot_dimension_numbers<[1], [0], [0], [1], [0, 0, 1, 1], [], []>} : vector<256x147xbf16>, vector<147x64xbf16>, vector<256x64xf32> -> vector<256x64xf32>
    %c0_3 = arith.constant 0 : index
    %c0_4 = arith.constant 0 : index
    %3 = vector.load %arg4[%c0_3, %c0_4] : memref<1x64xf32, #tpu.memory_space<vmem>>, vector<1x64xf32>
    %4 = vector.broadcast %3 : vector<1x64xf32> to vector<256x64xf32>
    %5 = arith.mulf %2, %4 : vector<256x64xf32>
    %c0_5 = arith.constant 0 : index
    %c0_6 = arith.constant 0 : index
    %6 = vector.load %arg5[%c0_5, %c0_6] : memref<1x64xf32, #tpu.memory_space<vmem>>, vector<1x64xf32>
    %7 = vector.broadcast %6 : vector<1x64xf32> to vector<256x64xf32>
    %8 = arith.addf %5, %7 : vector<256x64xf32>
    %cst_7 = arith.constant 0.000000e+00 : f32
    %9 = vector.broadcast %cst_7 : f32 to vector<256x64xf32>
    %10 = arith.maximumf %8, %9 : vector<256x64xf32>
    %11 = arith.truncf %10 : vector<256x64xf32> to vector<256x64xbf16>
    %c0_8 = arith.constant 0 : index
    %c0_9 = arith.constant 0 : index
    %12 = vector.load %arg6[%c0_8, %c0_9] : memref<256x64xbf16, #tpu.memory_space<vmem>>, vector<256x64xbf16>
    tpu.vector_store %arg6[%c0_8, %c0_9], %11 {strides = array<i32>} : memref<256x64xbf16, #tpu.memory_space<vmem>>, vector<256x64xbf16>,
    return
  }
  func.func @transform_0(%arg0: i32, %arg1: i32) -> (i32, i32) {
    %c0_i32 = arith.constant 0 : i32
    %c0_i32_0 = arith.constant 0 : i32
    return %arg0, %c0_i32 : i32, i32
  }
  func.func @transform_1(%arg0: i32, %arg1: i32) -> (i32, i32) {
    %c0_i32 = arith.constant 0 : i32
    %c0_i32_0 = arith.constant 0 : i32
    return %c0_i32, %arg1 : i32, i32
  }
  func.func @transform_2(%arg0: i32, %arg1: i32) -> (i32, i32) {
    %c0_i32 = arith.constant 0 : i32
    %c0_i32_0 = arith.constant 0 : i32
    return %c0_i32, %arg1 : i32, i32
  }
  func.func @transform_3(%arg0: i32, %arg1: i32) -> (i32, i32) {
    %c0_i32 = arith.constant 0 : i32
    %c0_i32_0 = arith.constant 0 : i32
    return %c0_i32, %arg1 : i32, i32
  }
  func.func @transform_4(%arg0: i32, %arg1: i32) -> (i32, i32) {
    %c0_i32 = arith.constant 0 : i32
    return %arg0, %arg1 : i32, i32
  }
}

</mosaic_0001>

<llo_original>
// kernel: tpu_custom_call.1
$region0: #{tpu_custom_call.1}
  #allocation0 [shape = 'u32[]', space=smem, size = 0x4, offset = 0x4, fixed_abs, tag = 'smem constant byte address 0x4 - core index']
  #allocation1 [shape = 'u32[144,128]{1,0:T(1,128)}', space=vmem, size = 0x12000, scoped, tag = 'internal scratch']
  %s0 = inlined_call_operand.vmem [shape: bf16[512,147], index: 0, kind: input, shape index: {}]
  %s1 = inlined_call_operand.vmem [shape: bf16[147,64], index: 1, kind: input, shape index: {}]
  %s2 = inlined_call_operand.vmem [shape: f32[1,64], index: 2, kind: input, shape index: {}]
  %s3 = inlined_call_operand.vmem [shape: f32[1,64], index: 3, kind: input, shape index: {}]
  %s4 = inlined_call_operand.vmem [shape: bf16[512,64], index: 4, kind: output, shape index: {}]
  %s5 = sld [smem:[#allocation0]]
  $region49: #{tpu_custom_call.1} parent=0
    _
  %s7 = ssub.s32 1, %s5
  %s8 = scalar_select 0, %s7, %s5
  loop: start=0, step=1, limit=4
  $region2: #{tpu_custom_call.1} parent=0 // loop_pre_header
    _
  $region3: #{tpu_custom_call.1} parent=0 // loop_header
    %s10 = sphi 0, %s14
    %p11 = scmp.ge.s32.totalorder %s10, 4
    %s17 = sphi 0, %s29
    %s18 = sphi 0, %s25
    %s19 = sphi 0, %s17
    %s20 = sphi 0, %s18
    %s21 = sphi 0, %s19
    %s22 = sphi 0, %s20
    %s32 = sphi 0, %s34
    %s35 = sphi 0, %s32
    %s36 = sphi 0, %s35
    %s52 = sphi 0, %s36
    %s58 = sphi 0, %s60
    %s61 = sphi 0, %s58
    %s62 = sphi 0, %s61
    %s78 = sphi 0, %s62
    %s84 = sphi 0, %s86
    %s87 = sphi 0, %s84
    %s88 = sphi 0, %s87
    %s104 = sphi 0, %s88
    %s110 = sphi 0, %s112
    %s113 = sphi 0, %s110
    %s114 = sphi 0, %s113
    %s130 = sphi 0, %s114
    %s138 = sphi 0, %s140
    %s141 = sphi 0, %s138
    %s142 = sphi 0, %s141
    %s158 = sphi 0, %s142
  $region4: #{tpu_custom_call.1} parent=0 // loop_header_branch
    %13 = sbr.rel (%p11) target = $region8
  $region5: #{tpu_custom_call.1} parent=0 // loop_body
    %s15 = ssub.s32 %s10, 1
    %s16 = ssub.s32 %s10, 2
    %s23 = sadd.s32 1, %s18
    %p24 = scmp.ge.s32.totalorder %s23, 1
    %s25 = scalar_select %p24, 0, %s23
    %s26 = sadd.s32 1, %s17
    %s27 = scalar_select %p24, %s26, %s17
    %p28 = scmp.ge.s32.totalorder %s27, 2
    %s29 = scalar_select %p28, 0, %s27
    %s30 = ssub.s32 %s17, %s29
    %p31 = scmp.eq.s32.totalorder %s30, 0
    %s33 = sadd.s32 %s32, 1
    %s34 = scalar_select %p31, %s32, %s33
    %p37 = pneg %p31
    %p38 = scmp.eq.s32.totalorder %s10, 1
    %p39 = por %p37, %p38
    %p40 = scmp.ne.s32.totalorder %s32, %s35
    %p41 = scmp.eq.s32.totalorder %s10, 0
    %p42 = por %p40, %p41
    %p43 = scmp.ne.s32.totalorder %s32, %s35
    %p44 = scmp.eq.s32.totalorder %s15, 1
    %p45 = por %p43, %p44
    %p46 = scmp.ne.s32.totalorder %s35, %s36
    %p47 = scmp.eq.s32.totalorder %s15, 0
    %p48 = por %p46, %p47
    %p49 = scmp.ne.s32.totalorder %s35, %s36
    %p50 = scmp.eq.s32.totalorder %s16, 1
    %p51 = por %p49, %p50
    %p53 = scmp.ne.s32.totalorder %s36, %s52
    %p54 = scmp.eq.s32.totalorder %s16, 0
    %p55 = por %p53, %p54
    %s56 = ssub.s32 %s18, %s25
    %p57 = scmp.eq.s32.totalorder %s56, 0
    %s59 = sadd.s32 %s58, 1
    %s60 = scalar_select %p57, %s58, %s59
    %p63 = pneg %p57
    %p64 = scmp.eq.s32.totalorder %s10, 1
    %p65 = por %p63, %p64
    %p66 = scmp.ne.s32.totalorder %s58, %s61
    %p67 = scmp.eq.s32.totalorder %s10, 0
    %p68 = por %p66, %p67
    %p69 = scmp.ne.s32.totalorder %s58, %s61
    %p70 = scmp.eq.s32.totalorder %s15, 1
    %p71 = por %p69, %p70
    %p72 = scmp.ne.s32.totalorder %s61, %s62
    %p73 = scmp.eq.s32.totalorder %s15, 0
    %p74 = por %p72, %p73
    %p75 = scmp.ne.s32.totalorder %s61, %s62
    %p76 = scmp.eq.s32.totalorder %s16, 1
    %p77 = por %p75, %p76
    %p79 = scmp.ne.s32.totalorder %s62, %s78
    %p80 = scmp.eq.s32.totalorder %s16, 0
    %p81 = por %p79, %p80
    %s82 = ssub.s32 %s18, %s25
    %p83 = scmp.eq.s32.totalorder %s82, 0
    %s85 = sadd.s32 %s84, 1
    %s86 = scalar_select %p83, %s84, %s85
    %p89 = pneg %p83
    %p90 = scmp.eq.s32.totalorder %s10, 1
    %p91 = por %p89, %p90
    %p92 = scmp.ne.s32.totalorder %s84, %s87
    %p93 = scmp.eq.s32.totalorder %s10, 0
    %p94 = por %p92, %p93
    %p95 = scmp.ne.s32.totalorder %s84, %s87
    %p96 = scmp.eq.s32.totalorder %s15, 1
    %p97 = por %p95, %p96
    %p98 = scmp.ne.s32.totalorder %s87, %s88
    %p99 = scmp.eq.s32.totalorder %s15, 0
    %p100 = por %p98, %p99
    %p101 = scmp.ne.s32.totalorder %s87, %s88
    %p102 = scmp.eq.s32.totalorder %s16, 1
    %p103 = por %p101, %p102
    %p105 = scmp.ne.s32.totalorder %s88, %s104
    %p106 = scmp.eq.s32.totalorder %s16, 0
    %p107 = por %p105, %p106
    %s108 = ssub.s32 %s18, %s25
    %p109 = scmp.eq.s32.totalorder %s108, 0
    %s111 = sadd.s32 %s110, 1
    %s112 = scalar_select %p109, %s110, %s111
    %p115 = pneg %p109
    %p116 = scmp.eq.s32.totalorder %s10, 1
    %p117 = por %p115, %p116
    %p118 = scmp.ne.s32.totalorder %s110, %s113
    %p119 = scmp.eq.s32.totalorder %s10, 0
    %p120 = por %p118, %p119
    %p121 = scmp.ne.s32.totalorder %s110, %s113
    %p122 = scmp.eq.s32.totalorder %s15, 1
    %p123 = por %p121, %p122
    %p124 = scmp.ne.s32.totalorder %s113, %s114
    %p125 = scmp.eq.s32.totalorder %s15, 0
    %p126 = por %p124, %p125
    %p127 = scmp.ne.s32.totalorder %s113, %s114
    %p128 = scmp.eq.s32.totalorder %s16, 1
    %p129 = por %p127, %p128
    %p131 = scmp.ne.s32.totalorder %s114, %s130
    %p132 = scmp.eq.s32.totalorder %s16, 0
    %p133 = por %p131, %p132
    %s134 = ssub.s32 %s17, %s29
    %s135 = ssub.s32 %s18, %s25
    %s136 = sor.u32 %s134, %s135
    %p137 = scmp.eq.s32.totalorder %s136, 0
    %s139 = sadd.s32 %s138, 1
    %s140 = scalar_select %p137, %s138, %s139
    %p143 = pneg %p137
    %p144 = scmp.eq.s32.totalorder %s10, 1
    %p145 = por %p143, %p144
    %p146 = scmp.ne.s32.totalorder %s138, %s141
    %p147 = scmp.eq.s32.totalorder %s10, 0
    %p148 = por %p146, %p147
    %p149 = scmp.ne.s32.totalorder %s138, %s141
    %p150 = scmp.eq.s32.totalorder %s15, 1
    %p151 = por %p149, %p150
    %p152 = scmp.ne.s32.totalorder %s141, %s142
    %p153 = scmp.eq.s32.totalorder %s15, 0
    %p154 = por %p152, %p153
    %p155 = scmp.ne.s32.totalorder %s141, %s142
    %p156 = scmp.eq.s32.totalorder %s16, 1
    %p157 = por %p155, %p156
    %p159 = scmp.ne.s32.totalorder %s142, %s158
    %p160 = scmp.eq.s32.totalorder %s16, 0
    %p161 = por %p159, %p160
    %p162 = scmp.le.s32.totalorder 1, %s10
    %p163 = scmp.lt.s32.totalorder %s10, 3
    %p164 = pnand %p162, %p163
    %p165 = pneg %p164
    // Predicated region
    $region9: #{tpu_custom_call.1} parent=5 // pred_check
      _
    $region10: #{tpu_custom_call.1} parent=5 // pred_check_branch
      %167 = sbr.rel (%p164) target = $region12
    $region11: #{tpu_custom_call.1} parent=5 // pred_region
      %s168 = ssub.s32 %s10, 1
      // Predicated region
      $region13: #{tpu_custom_call.1} parent=11 // pred_check
        %p169 = pneg %p74
      $region14: #{tpu_custom_call.1} parent=11 // pred_check_branch
        %171 = sbr.rel (%p169) target = $region16
      $region15: #{tpu_custom_call.1} parent=11 // pred_region
        %p172 = scmp.lt.s32.totalorder %s20, 0
        %s173 = scalar_select %p172, %s20, 0
        %s174 = smul.addr %s173, 4
        %s175 = scalar_lea.vmem %s1, %s174
      $region16: #{tpu_custom_call.1} parent=11 // pred_fallthru
        _
      // Predicated region
      $region17: #{tpu_custom_call.1} parent=11 // pred_check
        %p176 = pneg %p100
      $region18: #{tpu_custom_call.1} parent=11 // pred_check_branch
        %178 = sbr.rel (%p176) target = $region20
      $region19: #{tpu_custom_call.1} parent=11 // pred_region
        %p179 = scmp.lt.s32.totalorder %s20, 0
        %s180 = scalar_select %p179, %s20, 0
        %s181 = scalar_lea.vmem %s2, %s180
      $region20: #{tpu_custom_call.1} parent=11 // pred_fallthru
        _
      // Predicated region
      $region21: #{tpu_custom_call.1} parent=11 // pred_check
        %p182 = pneg %p126
      $region22: #{tpu_custom_call.1} parent=11 // pred_check_branch
        %184 = sbr.rel (%p182) target = $region24
      $region23: #{tpu_custom_call.1} parent=11 // pred_region
        %p185 = scmp.lt.s32.totalorder %s20, 0
        %s186 = scalar_select %p185, %s20, 0
        %s187 = scalar_lea.vmem %s3, %s186
      $region24: #{tpu_custom_call.1} parent=11 // pred_fallthru
        _
    $region12: #{tpu_custom_call.1} parent=5 // pred_fallthru
      _
    %p188 = scmp.lt.s32.totalorder %s10, 2
    // Predicated region
    $region25: #{tpu_custom_call.1} parent=5 // pred_check
      %p189 = pneg %p188
    $region26: #{tpu_custom_call.1} parent=5 // pred_check_branch
      %191 = sbr.rel (%p189) target = $region28
    $region27: #{tpu_custom_call.1} parent=5 // pred_region
      // Predicated region
      $region29: #{tpu_custom_call.1} parent=27 // pred_check
        %p192 = pneg %p42
      $region30: #{tpu_custom_call.1} parent=27 // pred_check_branch
        %194 = sbr.rel (%p192) target = $region32
      $region31: #{tpu_custom_call.1} parent=27 // pred_region
        %s195 = smul.u32 32, %s17
        %p196 = scmp.lt.s32.totalorder %s195, 63
        %s197 = scalar_select %p196, %s195, 63
        %s198 = smul.addr %s197, 2
        %s199 = smul.addr %s198, 4
        %s200 = scalar_lea.vmem %s0, %s199
        %s201 = smul.u32 32, %s17
      $region32: #{tpu_custom_call.1} parent=27 // pred_fallthru
        _
    $region28: #{tpu_custom_call.1} parent=5 // pred_fallthru
      _
    %p202 = scmp.le.s32.totalorder 1, %s10
    %p203 = scmp.lt.s32.totalorder %s10, 3
    %p204 = pnand %p202, %p203
    %p205 = pneg %p204
    // Predicated region
    $region33: #{tpu_custom_call.1} parent=5 // pred_check
      _
    $region34: #{tpu_custom_call.1} parent=5 // pred_check_branch
      %207 = sbr.rel (%p204) target = $region36
    $region35: #{tpu_custom_call.1} parent=5 // pred_region
      %s208 = ssub.s32 %s10, 1
      %s209 = smul.u32 32, %s19
      %p210 = scmp.lt.s32.totalorder %s209, 63
      %s211 = scalar_select %p210, %s209, 63
      %s212 = smul.addr %s211, 2
      %s213 = smul.addr %s212, 4
      %s214 = scalar_lea.vmem %s0, %s213
      %p215 = pneg %p48
      %p216 = pneg %p45
      %p217 = scmp.lt.s32.totalorder %s20, 0
      %s218 = scalar_select %p217, %s20, 0
      %s219 = smul.addr %s218, 4
      %s220 = scalar_lea.vmem %s1, %s219
      %p221 = pneg %p74
      %p222 = pneg %p71
      %p223 = scmp.lt.s32.totalorder %s20, 0
      %s224 = scalar_select %p223, %s20, 0
      %s225 = scalar_lea.vmem %s2, %s224
      %p226 = pneg %p100
      %p227 = pneg %p97
      %p228 = scmp.lt.s32.totalorder %s20, 0
      %s229 = scalar_select %p228, %s20, 0
      %s230 = scalar_lea.vmem %s3, %s229
      %p231 = pneg %p126
      %p232 = pneg %p123
      %p233 = pneg %p154
      %p234 = pneg %p151
      %s235 = smul.u32 32, %s19
      %p236 = scmp.lt.s32.totalorder %s235, 63
      %s237 = scalar_select %p236, %s235, 63
      %p238 = scmp.lt.s32.totalorder %s20, 0
      %s239 = scalar_select %p238, %s20, 0
      %s240 = sadd.s32 %s239, %s237
      %s241 = smul.addr %s240, 4
      %s242 = scalar_lea.vmem %s4, %s241
      %s243 = smul.u32 32, %s19
      %p244 = scmp.lt.s32.totalorder %s243, 63
      %s245 = scalar_select %p244, %s243, 63
      %s246 = smul.addr %s245, 2
      %s247 = smul.addr %s246, 4
      %s248 = scalar_lea.vmem %s0, %s247
      %s249 = smul.u32 32, %s19
      %p250 = scmp.lt.s32.totalorder %s20, 0
      %s251 = scalar_select %p250, %s20, 0
      %s252 = smul.addr %s251, 4
      %s253 = scalar_lea.vmem %s1, %s252
      %p254 = scmp.lt.s32.totalorder %s20, 0
      %s255 = scalar_select %p254, %s20, 0
      %s256 = scalar_lea.vmem %s2, %s255
      %p257 = scmp.lt.s32.totalorder %s20, 0
      %s258 = scalar_select %p257, %s20, 0
      %s259 = scalar_lea.vmem %s3, %s258
      %s260 = smul.u32 32, %s19
      %p261 = scmp.lt.s32.totalorder %s260, 63
      %s262 = scalar_select %p261, %s260, 63
      %p263 = scmp.lt.s32.totalorder %s20, 0
      %s264 = scalar_select %p263, %s20, 0
      %s265 = sadd.s32 %s264, %s262
      %s266 = smul.addr %s265, 4
      %s267 = scalar_lea.vmem %s4, %s266
      %s268 = smul.u32 32, %s19
      %v270 = vld [vmem:[%s248] sm:$0xff]
      %v271 = vld [vmem:[%s248 + $0x8] sm:$0xff]
      %v272 = vld [vmem:[%s248 + $0x10] sm:$0xff]
      %v273 = vld [vmem:[%s248 + $0x18] sm:$0xff]
      %v274 = vld [vmem:[%s248 + $0x20] sm:$0xff]
      %v275 = vld [vmem:[%s248 + $0x28] sm:$0xff]
      %v276 = vld [vmem:[%s248 + $0x30] sm:$0xff]
      %v277 = vld [vmem:[%s248 + $0x38] sm:$0xff]
      %v278 = vld [vmem:[%s248 + $0x40] sm:$0xff]
      %v279 = vld [vmem:[%s248 + $0x48] sm:$0xff]
      %v280 = vld [vmem:[%s248 + $0x50] sm:$0xff]
      %v281 = vld [vmem:[%s248 + $0x58] sm:$0xff]
      %v282 = vld [vmem:[%s248 + $0x60] sm:$0xff]
      %v283 = vld [vmem:[%s248 + $0x68] sm:$0xff]
      %v284 = vld [vmem:[%s248 + $0x70] sm:$0xff]
      %v285 = vld [vmem:[%s248 + $0x78] sm:$0xff]
      %v286 = vld [vmem:[%s248 + $0x80] sm:$0xff]
      %v287 = vld [vmem:[%s248 + $0x88] sm:$0xff]
      %v288 = vld [vmem:[%s248 + $0x90] sm:$0xff]
      %v289 = vld [vmem:[%s248 + $0x98] sm:$0xff]
      %v290 = vld [vmem:[%s248 + $0xa0] sm:$0xff]
      %v291 = vld [vmem:[%s248 + $0xa8] sm:$0xff]
      %v292 = vld [vmem:[%s248 + $0xb0] sm:$0xff]
      %v293 = vld [vmem:[%s248 + $0xb8] sm:$0xff]
      %v294 = vld [vmem:[%s248 + $0xc0] sm:$0xff]
      %v295 = vld [vmem:[%s248 + $0xc8] sm:$0xff]
      %v296 = vld [vmem:[%s248 + $0xd0] sm:$0xff]
      %v297 = vld [vmem:[%s248 + $0xd8] sm:$0xff]
      %v298 = vld [vmem:[%s248 + $0xe0] sm:$0xff]
      %v299 = vld [vmem:[%s248 + $0xe8] sm:$0xff]
      %v300 = vld [vmem:[%s248 + $0xf0] sm:$0xff]
      %v301 = vld [vmem:[%s248 + $0xf8] sm:$0xff]
      %v302 = vld [vmem:[%s253] sm:$0xf]
      %v303 = vld [vmem:[%s253 + $0x4] sm:$0xf]
      %v304 = vld [vmem:[%s253 + $0x8] sm:$0xf]
      %v305 = vld [vmem:[%s253 + $0xc] sm:$0xf]
      %v306 = vld [vmem:[%s253 + $0x10] sm:$0xf]
      %v307 = vld [vmem:[%s253 + $0x14] sm:$0xf]
      %v308 = vld [vmem:[%s253 + $0x18] sm:$0xf]
      %v309 = vld [vmem:[%s253 + $0x1c] sm:$0xf]
      %v310 = vld [vmem:[%s253 + $0x20] sm:$0xf]
      %v311 = vld [vmem:[%s253 + $0x24] sm:$0xf]
      %v312 = vld [vmem:[%s253 + $0x28] sm:$0xf]
      %v313 = vld [vmem:[%s253 + $0x2c] sm:$0xf]
      %v314 = vld [vmem:[%s253 + $0x30] sm:$0xf]
      %v315 = vld [vmem:[%s253 + $0x34] sm:$0xf]
      %v316 = vld [vmem:[%s253 + $0x38] sm:$0xf]
      %v317 = vld [vmem:[%s253 + $0x3c] sm:$0xf]
      %v318 = vld [vmem:[%s253 + $0x40] sm:$0xf]
      %v319 = vld [vmem:[%s253 + $0x44] sm:$0xf]
      %v320 = vld [vmem:[%s253 + $0x48] sm:$0x3]
      %v353 = vunpack.c.l.b16 %v270
      %v354 = vunpack.c.h.b16 %v270
      %v355 = vunpack.c.l.b16 %v271
      %v356 = vunpack.c.h.b16 %v271
      %v357 = vunpack.c.l.b16 %v272
      %v358 = vunpack.c.h.b16 %v272
      %v359 = vunpack.c.l.b16 %v273
      %v360 = vunpack.c.h.b16 %v273
      %v361 = vunpack.c.l.b16 %v274
      %v362 = vunpack.c.h.b16 %v274
      %v363 = vunpack.c.l.b16 %v275
      %v364 = vunpack.c.h.b16 %v275
      %v365 = vunpack.c.l.b16 %v276
      %v366 = vunpack.c.h.b16 %v276
      %v367 = vunpack.c.l.b16 %v277
      %v368 = vunpack.c.h.b16 %v277
      %v369 = vunpack.c.l.b16 %v278
      %v370 = vunpack.c.h.b16 %v278
      %v371 = vunpack.c.l.b16 %v279
      %v372 = vunpack.c.h.b16 %v279
      %v373 = vunpack.c.l.b16 %v280
      %v374 = vunpack.c.h.b16 %v280
      %v375 = vunpack.c.l.b16 %v281
      %v376 = vunpack.c.h.b16 %v281
      %v377 = vunpack.c.l.b16 %v282
      %v378 = vunpack.c.h.b16 %v282
      %v379 = vunpack.c.l.b16 %v283
      %v380 = vunpack.c.h.b16 %v283
      %v381 = vunpack.c.l.b16 %v284
      %v382 = vunpack.c.h.b16 %v284
      %v383 = vunpack.c.l.b16 %v285
      %v384 = vunpack.c.h.b16 %v285
      %v385 = vunpack.c.l.b16 %v286
      %v386 = vunpack.c.h.b16 %v286
      %v387 = vunpack.c.l.b16 %v287
      %v388 = vunpack.c.h.b16 %v287
      %v389 = vunpack.c.l.b16 %v288
      %v390 = vunpack.c.h.b16 %v288
      %v391 = vunpack.c.l.b16 %v289
      %v392 = vunpack.c.h.b16 %v289
      %v393 = vunpack.c.l.b16 %v290
      %v394 = vunpack.c.h.b16 %v290
      %v395 = vunpack.c.l.b16 %v291
      %v396 = vunpack.c.h.b16 %v291
      %v397 = vunpack.c.l.b16 %v292
      %v398 = vunpack.c.h.b16 %v292
      %v399 = vunpack.c.l.b16 %v293
      %v400 = vunpack.c.h.b16 %v293
      %v401 = vunpack.c.l.b16 %v294
      %v402 = vunpack.c.h.b16 %v294
      %v403 = vunpack.c.l.b16 %v295
      %v404 = vunpack.c.h.b16 %v295
      %v405 = vunpack.c.l.b16 %v296
      %v406 = vunpack.c.h.b16 %v296
      %v407 = vunpack.c.l.b16 %v297
      %v408 = vunpack.c.h.b16 %v297
      %v409 = vunpack.c.l.b16 %v298
      %v410 = vunpack.c.h.b16 %v298
      %v411 = vunpack.c.l.b16 %v299
      %v412 = vunpack.c.h.b16 %v299
      %v413 = vunpack.c.l.b16 %v300
      %v414 = vunpack.c.h.b16 %v300
      %v415 = vunpack.c.l.b16 %v301
      %v416 = vunpack.c.h.b16 %v301
      %v417 = vpack.c.b16 %v355, %v353
      %v418 = vpack.c.b16 %v356, %v354
      %v419 = vpack.c.b16 %v359, %v357
      %v420 = vpack.c.b16 %v360, %v358
      %v421 = vpack.c.b16 %v363, %v361
      %v422 = vpack.c.b16 %v364, %v362
      %v423 = vpack.c.b16 %v367, %v365
      %v424 = vpack.c.b16 %v368, %v366
      %v425 = vpack.c.b16 %v371, %v369
      %v426 = vpack.c.b16 %v372, %v370
      %v427 = vpack.c.b16 %v375, %v373
      %v428 = vpack.c.b16 %v376, %v374
      %v429 = vpack.c.b16 %v379, %v377
      %v430 = vpack.c.b16 %v380, %v378
      %v431 = vpack.c.b16 %v383, %v381
      %v432 = vpack.c.b16 %v384, %v382
      %v433 = vpack.c.b16 %v387, %v385
      %v434 = vpack.c.b16 %v388, %v386
      %v435 = vpack.c.b16 %v391, %v389
      %v436 = vpack.c.b16 %v392, %v390
      %v437 = vpack.c.b16 %v395, %v393
      %v438 = vpack.c.b16 %v396, %v394
      %v439 = vpack.c.b16 %v399, %v397
      %v440 = vpack.c.b16 %v400, %v398
      %v441 = vpack.c.b16 %v403, %v401
      %v442 = vpack.c.b16 %v404, %v402
      %v443 = vpack.c.b16 %v407, %v405
      %v444 = vpack.c.b16 %v408, %v406
      %v445 = vpack.c.b16 %v411, %v409
      %v446 = vpack.c.b16 %v412, %v410
      %v447 = vpack.c.b16 %v415, %v413
      %v448 = vpack.c.b16 %v416, %v414
      %v484 = vunpack.c.l.b16 %v302
      %v485 = vunpack.c.l.b16 %v303
      %v486 = vunpack.c.l.b16 %v304
      %v487 = vunpack.c.l.b16 %v305
      %v488 = vunpack.c.l.b16 %v306
      %v489 = vunpack.c.l.b16 %v307
      %v490 = vunpack.c.l.b16 %v308
      %v491 = vunpack.c.l.b16 %v309
      %v492 = vunpack.c.l.b16 %v310
      %v493 = vunpack.c.l.b16 %v311
      %v494 = vunpack.c.l.b16 %v312
      %v495 = vunpack.c.l.b16 %v313
      %v496 = vunpack.c.l.b16 %v314
      %v497 = vunpack.c.l.b16 %v315
      %v498 = vunpack.c.l.b16 %v316
      %v499 = vunpack.c.l.b16 %v317
      %v500 = vunpack.c.l.b16 %v318
      %v501 = vunpack.c.l.b16 %v319
      %v502 = vunpack.c.l.b16 %v320
      %v503 = vpack.c.b16 %v485, %v484
      %v504 = vpack.c.b16 %v487, %v486
      %v505 = vpack.c.b16 %v489, %v488
      %v506 = vpack.c.b16 %v491, %v490
      %v507 = vpack.c.b16 %v493, %v492
      %v508 = vpack.c.b16 %v495, %v494
      %v509 = vpack.c.b16 %v497, %v496
      %v510 = vpack.c.b16 %v499, %v498
      %v511 = vpack.c.b16 %v501, %v500
      %v512 = vpack.c.b16 %v502, %v502
      %vm522 = vcmask 154624
      %v524 = vsel %vm522, %v418, 0
      %v527 = vsel %vm522, %v420, 0
      %v530 = vsel %vm522, %v422, 0
      %v533 = vsel %vm522, %v424, 0
      %v536 = vsel %vm522, %v426, 0
      %v539 = vsel %vm522, %v428, 0
      %v542 = vsel %vm522, %v430, 0
      %v545 = vsel %vm522, %v432, 0
      %v548 = vsel %vm522, %v434, 0
      %v551 = vsel %vm522, %v436, 0
      %v554 = vsel %vm522, %v438, 0
      %v557 = vsel %vm522, %v440, 0
      %v560 = vsel %vm522, %v442, 0
      %v563 = vsel %vm522, %v444, 0
      %v566 = vsel %vm522, %v446, 0
      %v569 = vsel %vm522, %v448, 0
      %vm571 = vcmask 1040384
      %vm572 = vcmask 1041408
      %v573 = vsel %vm571, 4294967295, 65535
      %v574 = vsel %vm572, %v573, 0
      %v576 = vand.u32 %v512, %v574
      %578 = vmatprep.subr.bf16.mxu0 0
      %579 = vmatpush1.bf16.msra.mxu0 %v503
      %580 = vmatprep.subr.bf16.mxu0 0
      %581 = vmatpush1.bf16.msra.mxu0 %v504
      %582 = vmatprep.subr.bf16.mxu0 0
      %583 = vmatpush1.bf16.msra.mxu0 %v505
      %584 = vmatprep.subr.bf16.mxu0 0
      %585 = vmatpush1.bf16.msra.mxu0 %v506
      %586 = vmatprep.subr.bf16.mxu0 0
      %587 = vmatpush1.bf16.msra.mxu0 %v507
      %588 = vmatprep.subr.bf16.mxu0 0
      %589 = vmatpush1.bf16.msra.mxu0 %v508
      %590 = vmatprep.subr.bf16.mxu0 0
      %591 = vmatpush1.bf16.msra.mxu0 %v509
      %592 = vmatprep.subr.bf16.mxu0 0
      %593 = vmatpush1.bf16.msra.mxu0 %v510
      %594 = vmatprep.subr.bf16.mxu0 0
      %595 = vmatpush1.bf16.msra.mxu0 %v511
      %596 = vmatprep.subr.bf16.mxu0 0
      %597 = vmatpush1.bf16.msra.mxu0 %v576
      %598 = vmatprep.subr.bf16.mxu0 0
      %599 = vmatpush1.bf16.msra.mxu0 0
      %600 = vmatprep.subr.bf16.mxu0 0
      %601 = vmatpush1.bf16.msra.mxu0 0
      %602 = vmatprep.subr.bf16.mxu0 0
      %603 = vmatpush1.bf16.msra.mxu0 0
      %604 = vmatprep.subr.bf16.mxu0 0
      %605 = vmatpush1.bf16.msra.mxu0 0
      %606 = vmatprep.subr.bf16.mxu0 0
      %607 = vmatpush1.bf16.msra.mxu0 0
      %608 = vmatprep.subr.bf16.mxu0 0
      %609 = vmatpush1.bf16.msra.mxu0 0
      %610 = vmatprep.mubr.bf16.mxu0 %v524
      %611 = vmatmul.mubr.bf16.gmra.mrb[0].mxu0 %v417
      %v612 = vpop.f32.mrb[0].mxu0
      %v613 = vadd.f32 0.0, %v612
      %v614 = vpop.f32.mrb[0].mxu0
      %v615 = vpop.f32.mrb[0].mxu0
      %v616 = vadd.f32 0.0, %v615
      %v617 = vpop.f32.mrb[0].mxu0
      %618 = vmatprep.mubr.bf16.mxu0 %v527
      %619 = vmatmul.mubr.bf16.gmra.mrb[0].mxu0 %v419
      %v620 = vpop.f32.mrb[0].mxu0
      %v621 = vadd.f32 0.0, %v620
      %v622 = vpop.f32.mrb[0].mxu0
      %v623 = vpop.f32.mrb[0].mxu0
      %v624 = vadd.f32 0.0, %v623
      %v625 = vpop.f32.mrb[0].mxu0
      %626 = vmatprep.mubr.bf16.mxu0 %v530
      %627 = vmatmul.mubr.bf16.gmra.mrb[0].mxu0 %v421
      %v628 = vpop.f32.mrb[0].mxu0
      %v629 = vadd.f32 0.0, %v628
      %v630 = vpop.f32.mrb[0].mxu0
      %v631 = vpop.f32.mrb[0].mxu0
      %v632 = vadd.f32 0.0, %v631
      %v633 = vpop.f32.mrb[0].mxu0
      %634 = vmatprep.mubr.bf16.mxu0 %v533
      %635 = vmatmul.mubr.bf16.gmra.mrb[0].mxu0 %v423
      %v636 = vpop.f32.mrb[0].mxu0
      %v637 = vadd.f32 0.0, %v636
      %v638 = vpop.f32.mrb[0].mxu0
      %v639 = vpop.f32.mrb[0].mxu0
      %v640 = vadd.f32 0.0, %v639
      %v641 = vpop.f32.mrb[0].mxu0
      %642 = vmatprep.mubr.bf16.mxu0 %v536
      %643 = vmatmul.mubr.bf16.gmra.mrb[0].mxu0 %v425
      %v644 = vpop.f32.mrb[0].mxu0
      %v645 = vadd.f32 0.0, %v644
      %v646 = vpop.f32.mrb[0].mxu0
      %v647 = vpop.f32.mrb[0].mxu0
      %v648 = vadd.f32 0.0, %v647
      %v649 = vpop.f32.mrb[0].mxu0
      %650 = vmatprep.mubr.bf16.mxu0 %v539
      %651 = vmatmul.mubr.bf16.gmra.mrb[0].mxu0 %v427
      %v652 = vpop.f32.mrb[0].mxu0
      %v653 = vadd.f32 0.0, %v652
      %v654 = vpop.f32.mrb[0].mxu0
      %v655 = vpop.f32.mrb[0].mxu0
      %v656 = vadd.f32 0.0, %v655
      %v657 = vpop.f32.mrb[0].mxu0
      %658 = vmatprep.mubr.bf16.mxu0 %v542
      %659 = vmatmul.mubr.bf16.gmra.mrb[0].mxu0 %v429
      %v660 = vpop.f32.mrb[0].mxu0
      %v661 = vadd.f32 0.0, %v660
      %v662 = vpop.f32.mrb[0].mxu0
      %v663 = vpop.f32.mrb[0].mxu0
      %v664 = vadd.f32 0.0, %v663
      %v665 = vpop.f32.mrb[0].mxu0
      %666 = vmatprep.mubr.bf16.mxu0 %v545
      %667 = vmatmul.mubr.bf16.gmra.mrb[0].mxu0 %v431
      %v668 = vpop.f32.mrb[0].mxu0
      %v669 = vadd.f32 0.0, %v668
      %v670 = vpop.f32.mrb[0].mxu0
      %v671 = vpop.f32.mrb[0].mxu0
      %v672 = vadd.f32 0.0, %v671
      %v673 = vpop.f32.mrb[0].mxu0
      %674 = vmatprep.mubr.bf16.mxu0 %v548
      %675 = vmatmul.mubr.bf16.gmra.mrb[0].mxu0 %v433
      %v676 = vpop.f32.mrb[0].mxu0
      %v677 = vadd.f32 0.0, %v676
      %v678 = vpop.f32.mrb[0].mxu0
      %v679 = vpop.f32.mrb[0].mxu0
      %v680 = vadd.f32 0.0, %v679
      %v681 = vpop.f32.mrb[0].mxu0
      %682 = vmatprep.mubr.bf16.mxu0 %v551
      %683 = vmatmul.mubr.bf16.gmra.mrb[0].mxu0 %v435
      %v684 = vpop.f32.mrb[0].mxu0
      %v685 = vadd.f32 0.0, %v684
      %v686 = vpop.f32.mrb[0].mxu0
      %v687 = vpop.f32.mrb[0].mxu0
      %v688 = vadd.f32 0.0, %v687
      %v689 = vpop.f32.mrb[0].mxu0
      %690 = vmatprep.mubr.bf16.mxu0 %v554
      %691 = vmatmul.mubr.bf16.gmra.mrb[0].mxu0 %v437
      %v692 = vpop.f32.mrb[0].mxu0
      %v693 = vadd.f32 0.0, %v692
      %v694 = vpop.f32.mrb[0].mxu0
      %v695 = vpop.f32.mrb[0].mxu0
      %v696 = vadd.f32 0.0, %v695
      %v697 = vpop.f32.mrb[0].mxu0
      %698 = vmatprep.mubr.bf16.mxu0 %v557
      %699 = vmatmul.mubr.bf16.gmra.mrb[0].mxu0 %v439
      %v700 = vpop.f32.mrb[0].mxu0
      %v701 = vadd.f32 0.0, %v700
      %v702 = vpop.f32.mrb[0].mxu0
      %v703 = vpop.f32.mrb[0].mxu0
      %v704 = vadd.f32 0.0, %v703
      %v705 = vpop.f32.mrb[0].mxu0
      %706 = vmatprep.mubr.bf16.mxu0 %v560
      %707 = vmatmul.mubr.bf16.gmra.mrb[0].mxu0 %v441
      %v708 = vpop.f32.mrb[0].mxu0
      %v709 = vadd.f32 0.0, %v708
      %v710 = vpop.f32.mrb[0].mxu0
      %v711 = vpop.f32.mrb[0].mxu0
      %v712 = vadd.f32 0.0, %v711
      %v713 = vpop.f32.mrb[0].mxu0
      %714 = vmatprep.mubr.bf16.mxu0 %v563
      %715 = vmatmul.mubr.bf16.gmra.mrb[0].mxu0 %v443
      %v716 = vpop.f32.mrb[0].mxu0
      %v717 = vadd.f32 0.0, %v716
      %v718 = vpop.f32.mrb[0].mxu0
      %v719 = vpop.f32.mrb[0].mxu0
      %v720 = vadd.f32 0.0, %v719
      %v721 = vpop.f32.mrb[0].mxu0
      %722 = vmatprep.mubr.bf16.mxu0 %v566
      %723 = vmatmul.mubr.bf16.gmra.mrb[0].mxu0 %v445
      %v724 = vpop.f32.mrb[0].mxu0
      %v725 = vadd.f32 0.0, %v724
      %v726 = vpop.f32.mrb[0].mxu0
      %v727 = vpop.f32.mrb[0].mxu0
      %v728 = vadd.f32 0.0, %v727
      %v729 = vpop.f32.mrb[0].mxu0
      %730 = vmatprep.mubr.bf16.mxu0 %v569
      %731 = vmatmul.mubr.bf16.gmra.mrb[0].mxu0 %v447
      %v732 = vpop.f32.mrb[0].mxu0
      %v733 = vadd.f32 0.0, %v732
      %v734 = vpop.f32.mrb[0].mxu0
      %v735 = vpop.f32.mrb[0].mxu0
      %v736 = vadd.f32 0.0, %v735
      %v737 = vpop.f32.mrb[0].mxu0
      %738 = vdwg.mxu0
      %v739 = vld [vmem:[%s256] sm:$0x1]
      %v741 = vlaneseq
      %v742 = vshrl.u32 %v741, 7
      %v743 = vsub.s32 0, %v742
      %v744 = vrot.slane %v739, %v743
      %v746 = vmul.f32 %v613, %v744
      %v747 = vmul.f32 %v616, %v744
      %v748 = vmul.f32 %v621, %v744
      %v749 = vmul.f32 %v624, %v744
      %v750 = vmul.f32 %v629, %v744
      %v751 = vmul.f32 %v632, %v744
      %v752 = vmul.f32 %v637, %v744
      %v753 = vmul.f32 %v640, %v744
      %v754 = vmul.f32 %v645, %v744
      %v755 = vmul.f32 %v648, %v744
      %v756 = vmul.f32 %v653, %v744
      %v757 = vmul.f32 %v656, %v744
      %v758 = vmul.f32 %v661, %v744
      %v759 = vmul.f32 %v664, %v744
      %v760 = vmul.f32 %v669, %v744
      %v761 = vmul.f32 %v672, %v744
      %v762 = vmul.f32 %v677, %v744
      %v763 = vmul.f32 %v680, %v744
      %v764 = vmul.f32 %v685, %v744
      %v765 = vmul.f32 %v688, %v744
      %v766 = vmul.f32 %v693, %v744
      %v767 = vmul.f32 %v696, %v744
      %v768 = vmul.f32 %v701, %v744
      %v769 = vmul.f32 %v704, %v744
      %v770 = vmul.f32 %v709, %v744
      %v771 = vmul.f32 %v712, %v744
      %v772 = vmul.f32 %v717, %v744
      %v773 = vmul.f32 %v720, %v744
      %v774 = vmul.f32 %v725, %v744
      %v775 = vmul.f32 %v728, %v744
      %v776 = vmul.f32 %v733, %v744
      %v777 = vmul.f32 %v736, %v744
      %v778 = vld [vmem:[%s259] sm:$0x1]
      %v780 = vlaneseq
      %v781 = vshrl.u32 %v780, 7
      %v782 = vsub.s32 0, %v781
      %v783 = vrot.slane %v778, %v782
      %v785 = vadd.f32 %v746, %v783
      %v786 = vadd.f32 %v747, %v783
      %v787 = vadd.f32 %v748, %v783
      %v788 = vadd.f32 %v749, %v783
      %v789 = vadd.f32 %v750, %v783
      %v790 = vadd.f32 %v751, %v783
      %v791 = vadd.f32 %v752, %v783
      %v792 = vadd.f32 %v753, %v783
      %v793 = vadd.f32 %v754, %v783
      %v794 = vadd.f32 %v755, %v783
      %v795 = vadd.f32 %v756, %v783
      %v796 = vadd.f32 %v757, %v783
      %v797 = vadd.f32 %v758, %v783
      %v798 = vadd.f32 %v759, %v783
      %v799 = vadd.f32 %v760, %v783
      %v800 = vadd.f32 %v761, %v783
      %v801 = vadd.f32 %v762, %v783
      %v802 = vadd.f32 %v763, %v783
      %v803 = vadd.f32 %v764, %v783
      %v804 = vadd.f32 %v765, %v783
      %v805 = vadd.f32 %v766, %v783
      %v806 = vadd.f32 %v767, %v783
      %v807 = vadd.f32 %v768, %v783
      %v808 = vadd.f32 %v769, %v783
      %v809 = vadd.f32 %v770, %v783
      %v810 = vadd.f32 %v771, %v783
      %v811 = vadd.f32 %v772, %v783
      %v812 = vadd.f32 %v773, %v783
      %v813 = vadd.f32 %v774, %v783
      %v814 = vadd.f32 %v775, %v783
      %v815 = vadd.f32 %v776, %v783
      %v816 = vadd.f32 %v777, %v783
      %v817 = vmax.f32 %v785, 0.0
      %v818 = vmax.f32 %v786, 0.0
      %v819 = vmax.f32 %v787, 0.0
      %v820 = vmax.f32 %v788, 0.0
      %v821 = vmax.f32 %v789, 0.0
      %v822 = vmax.f32 %v790, 0.0
      %v823 = vmax.f32 %v791, 0.0
      %v824 = vmax.f32 %v792, 0.0
      %v825 = vmax.f32 %v793, 0.0
      %v826 = vmax.f32 %v794, 0.0
      %v827 = vmax.f32 %v795, 0.0
      %v828 = vmax.f32 %v796, 0.0
      %v829 = vmax.f32 %v797, 0.0
      %v830 = vmax.f32 %v798, 0.0
      %v831 = vmax.f32 %v799, 0.0
      %v832 = vmax.f32 %v800, 0.0
      %v833 = vmax.f32 %v801, 0.0
      %v834 = vmax.f32 %v802, 0.0
      %v835 = vmax.f32 %v803, 0.0
      %v836 = vmax.f32 %v804, 0.0
      %v837 = vmax.f32 %v805, 0.0
      %v838 = vmax.f32 %v806, 0.0
      %v839 = vmax.f32 %v807, 0.0
      %v840 = vmax.f32 %v808, 0.0
      %v841 = vmax.f32 %v809, 0.0
      %v842 = vmax.f32 %v810, 0.0
      %v843 = vmax.f32 %v811, 0.0
      %v844 = vmax.f32 %v812, 0.0
      %v845 = vmax.f32 %v813, 0.0
      %v846 = vmax.f32 %v814, 0.0
      %v847 = vmax.f32 %v815, 0.0
      %v848 = vmax.f32 %v816, 0.0
      %v849 = vpack.c.bf16 %v818, %v817
      %v850 = vpack.c.bf16 %v820, %v819
      %v851 = vpack.c.bf16 %v822, %v821
      %v852 = vpack.c.bf16 %v824, %v823
      %v853 = vpack.c.bf16 %v826, %v825
      %v854 = vpack.c.bf16 %v828, %v827
      %v855 = vpack.c.bf16 %v830, %v829
      %v856 = vpack.c.bf16 %v832, %v831
      %v857 = vpack.c.bf16 %v834, %v833
      %v858 = vpack.c.bf16 %v836, %v835
      %v859 = vpack.c.bf16 %v838, %v837
      %v860 = vpack.c.bf16 %v840, %v839
      %v861 = vpack.c.bf16 %v842, %v841
      %v862 = vpack.c.bf16 %v844, %v843
      %v863 = vpack.c.bf16 %v846, %v845
      %v864 = vpack.c.bf16 %v848, %v847
      %v881 = vunpack.c.l.b16 %v849
      %v882 = vunpack.c.h.b16 %v849
      %v883 = vunpack.c.l.b16 %v850
      %v884 = vunpack.c.h.b16 %v850
      %v885 = vunpack.c.l.b16 %v851
      %v886 = vunpack.c.h.b16 %v851
      %v887 = vunpack.c.l.b16 %v852
      %v888 = vunpack.c.h.b16 %v852
      %v889 = vunpack.c.l.b16 %v853
      %v890 = vunpack.c.h.b16 %v853
      %v891 = vunpack.c.l.b16 %v854
      %v892 = vunpack.c.h.b16 %v854
      %v893 = vunpack.c.l.b16 %v855
      %v894 = vunpack.c.h.b16 %v855
      %v895 = vunpack.c.l.b16 %v856
      %v896 = vunpack.c.h.b16 %v856
      %v897 = vunpack.c.l.b16 %v857
      %v898 = vunpack.c.h.b16 %v857
      %v899 = vunpack.c.l.b16 %v858
      %v900 = vunpack.c.h.b16 %v858
      %v901 = vunpack.c.l.b16 %v859
      %v902 = vunpack.c.h.b16 %v859
      %v903 = vunpack.c.l.b16 %v860
      %v904 = vunpack.c.h.b16 %v860
      %v905 = vunpack.c.l.b16 %v861
      %v906 = vunpack.c.h.b16 %v861
      %v907 = vunpack.c.l.b16 %v862
      %v908 = vunpack.c.h.b16 %v862
      %v909 = vunpack.c.l.b16 %v863
      %v910 = vunpack.c.h.b16 %v863
      %v911 = vunpack.c.l.b16 %v864
      %v912 = vunpack.c.h.b16 %v864
      %v913 = vpack.c.b16 %v881, %v881
      %v914 = vpack.c.b16 %v882, %v882
      %v915 = vpack.c.b16 %v883, %v883
      %v916 = vpack.c.b16 %v884, %v884
      %v917 = vpack.c.b16 %v885, %v885
      %v918 = vpack.c.b16 %v886, %v886
      %v919 = vpack.c.b16 %v887, %v887
      %v920 = vpack.c.b16 %v888, %v888
      %v921 = vpack.c.b16 %v889, %v889
      %v922 = vpack.c.b16 %v890, %v890
      %v923 = vpack.c.b16 %v891, %v891
      %v924 = vpack.c.b16 %v892, %v892
      %v925 = vpack.c.b16 %v893, %v893
      %v926 = vpack.c.b16 %v894, %v894
      %v927 = vpack.c.b16 %v895, %v895
      %v928 = vpack.c.b16 %v896, %v896
      %v929 = vpack.c.b16 %v897, %v897
      %v930 = vpack.c.b16 %v898, %v898
      %v931 = vpack.c.b16 %v899, %v899
      %v932 = vpack.c.b16 %v900, %v900
      %v933 = vpack.c.b16 %v901, %v901
      %v934 = vpack.c.b16 %v902, %v902
      %v935 = vpack.c.b16 %v903, %v903
      %v936 = vpack.c.b16 %v904, %v904
      %v937 = vpack.c.b16 %v905, %v905
      %v938 = vpack.c.b16 %v906, %v906
      %v939 = vpack.c.b16 %v907, %v907
      %v940 = vpack.c.b16 %v908, %v908
      %v941 = vpack.c.b16 %v909, %v909
      %v942 = vpack.c.b16 %v910, %v910
      %v943 = vpack.c.b16 %v911, %v911
      %v944 = vpack.c.b16 %v912, %v912
      %vm977 = vcmask 519168
      %978 = vst.msk [vmem:[%s267] sm:$0xf] %vm977, %v913
      %979 = vst.msk [vmem:[%s267 + $0x4] sm:$0xf] %vm977, %v914
      %980 = vst.msk [vmem:[%s267 + $0x8] sm:$0xf] %vm977, %v915
      %981 = vst.msk [vmem:[%s267 + $0xc] sm:$0xf] %vm977, %v916
      %982 = vst.msk [vmem:[%s267 + $0x10] sm:$0xf] %vm977, %v917
      %983 = vst.msk [vmem:[%s267 + $0x14] sm:$0xf] %vm977, %v918
      %984 = vst.msk [vmem:[%s267 + $0x18] sm:$0xf] %vm977, %v919
      %985 = vst.msk [vmem:[%s267 + $0x1c] sm:$0xf] %vm977, %v920
      %986 = vst.msk [vmem:[%s267 + $0x20] sm:$0xf] %vm977, %v921
      %987 = vst.msk [vmem:[%s267 + $0x24] sm:$0xf] %vm977, %v922
      %988 = vst.msk [vmem:[%s267 + $0x28] sm:$0xf] %vm977, %v923
      %989 = vst.msk [vmem:[%s267 + $0x2c] sm:$0xf] %vm977, %v924
      %990 = vst.msk [vmem:[%s267 + $0x30] sm:$0xf] %vm977, %v925
      %991 = vst.msk [vmem:[%s267 + $0x34] sm:$0xf] %vm977, %v926
      %992 = vst.msk [vmem:[%s267 + $0x38] sm:$0xf] %vm977, %v927
      %993 = vst.msk [vmem:[%s267 + $0x3c] sm:$0xf] %vm977, %v928
      %994 = vst.msk [vmem:[%s267 + $0x40] sm:$0xf] %vm977, %v929
      %995 = vst.msk [vmem:[%s267 + $0x44] sm:$0xf] %vm977, %v930
      %996 = vst.msk [vmem:[%s267 + $0x48] sm:$0xf] %vm977, %v931
      %997 = vst.msk [vmem:[%s267 + $0x4c] sm:$0xf] %vm977, %v932
      %998 = vst.msk [vmem:[%s267 + $0x50] sm:$0xf] %vm977, %v933
      %999 = vst.msk [vmem:[%s267 + $0x54] sm:$0xf] %vm977, %v934
      %1000 = vst.msk [vmem:[%s267 + $0x58] sm:$0xf] %vm977, %v935
      %1001 = vst.msk [vmem:[%s267 + $0x5c] sm:$0xf] %vm977, %v936
      %1002 = vst.msk [vmem:[%s267 + $0x60] sm:$0xf] %vm977, %v937
      %1003 = vst.msk [vmem:[%s267 + $0x64] sm:$0xf] %vm977, %v938
      %1004 = vst.msk [vmem:[%s267 + $0x68] sm:$0xf] %vm977, %v939
      %1005 = vst.msk [vmem:[%s267 + $0x6c] sm:$0xf] %vm977, %v940
      %1006 = vst.msk [vmem:[%s267 + $0x70] sm:$0xf] %vm977, %v941
      %1007 = vst.msk [vmem:[%s267 + $0x74] sm:$0xf] %vm977, %v942
      %1008 = vst.msk [vmem:[%s267 + $0x78] sm:$0xf] %vm977, %v943
      %1009 = vst.msk [vmem:[%s267 + $0x7c] sm:$0xf] %vm977, %v944
      %s1010 = smul.u32 32, %s19
      %p1011 = scmp.lt.s32.totalorder %s1010, 63
      %s1012 = scalar_select %p1011, %s1010, 63
      %p1013 = scmp.lt.s32.totalorder %s20, 0
      %s1014 = scalar_select %p1013, %s20, 0
      %s1015 = sadd.s32 %s1014, %s1012
      %s1016 = smul.addr %s1015, 4
      %s1017 = scalar_lea.vmem %s4, %s1016
      // Predicated region
      $region37: #{tpu_custom_call.1} parent=35 // pred_check
        %p1018 = pneg %p151
      $region38: #{tpu_custom_call.1} parent=35 // pred_check_branch
        %1020 = sbr.rel (%p1018) target = $region40
      $region39: #{tpu_custom_call.1} parent=35 // pred_region
        %s1021 = smul.u32 32, %s19
      $region40: #{tpu_custom_call.1} parent=35 // pred_fallthru
        _
    $region36: #{tpu_custom_call.1} parent=5 // pred_fallthru
      _
    %p1022 = scmp.le.s32.totalorder 2, %s10
    // Predicated region
    $region41: #{tpu_custom_call.1} parent=5 // pred_check
      %p1023 = pneg %p1022
    $region42: #{tpu_custom_call.1} parent=5 // pred_check_branch
      %1025 = sbr.rel (%p1023) target = $region44
    $region43: #{tpu_custom_call.1} parent=5 // pred_region
      %s1026 = ssub.s32 %s10, 2
      // Predicated region
      $region45: #{tpu_custom_call.1} parent=43 // pred_check
        %p1027 = pneg %p157
      $region46: #{tpu_custom_call.1} parent=43 // pred_check_branch
        %1029 = sbr.rel (%p1027) target = $region48
      $region47: #{tpu_custom_call.1} parent=43 // pred_region
        %s1030 = smul.u32 32, %s21
        %p1031 = scmp.lt.s32.totalorder %s1030, 63
        %s1032 = scalar_select %p1031, %s1030, 63
        %p1033 = scmp.lt.s32.totalorder %s22, 0
        %s1034 = scalar_select %p1033, %s22, 0
        %s1035 = sadd.s32 %s1034, %s1032
        %s1036 = smul.addr %s1035, 4
        %s1037 = scalar_lea.vmem %s4, %s1036
      $region48: #{tpu_custom_call.1} parent=43 // pred_fallthru
        _
    $region44: #{tpu_custom_call.1} parent=5 // pred_fallthru
      _
  $region6: #{tpu_custom_call.1} parent=0 // loop_footer
    %s14 = sadd.s32 1, %s10
  $region7: #{tpu_custom_call.1} parent=0 // loop_footer_branch
    %9 = sbr.rel target = $region3
  $region8: #{tpu_custom_call.1} parent=0 // loop_exit
    _

</llo_original>
